<compile_context>
chip_gen: v7x
topology: tpu7x:2x2x1
jax: 0.10.0
libtpu: 0.0.40
codegen_flags: <defaults>
</compile_context>

<pallas_src>
import math
import functools

import jax
import jax.numpy as jnp
from jax.experimental import pallas as pl
from jax.experimental.pallas import tpu as pltpu

BN_EPS = 1e-5  # PyTorch BatchNorm2d / SyncBatchNorm default


def _round_up(x, m):
    return (x + m - 1) // m * m


# ----------------------------------------------------------------------------
# Pallas kernel: tiled bf16 matmul (f32 accumulate) + bias (+ optional ReLU6)
# ----------------------------------------------------------------------------
def _matmul_bias_kernel(x_ref, w_ref, b_ref, o_ref, *, relu6):
    acc = jnp.dot(x_ref[...], w_ref[...], preferred_element_type=jnp.float32)
    acc = acc + b_ref[...]
    if relu6:
        acc = jnp.clip(acc, 0.0, 6.0)
    o_ref[...] = acc.astype(o_ref.dtype)


def matmul_bias_act(x, w, bias, relu6=False):
    """y[M,N] = clip?(x[M,K] @ w[K,N] + bias[N]).  x/w run on the MXU in bf16."""
    M, K = x.shape
    K2, N = w.shape
    assert K == K2

    xb = x.astype(jnp.bfloat16)
    wb = w.astype(jnp.bfloat16)
    bias = bias.astype(jnp.float32)

    # Lane-dense output: pad N up to a multiple of 128, slice after the kernel.
    Np = _round_up(N, 128)
    if Np != N:
        wb = jnp.pad(wb, ((0, 0), (0, Np - N)))
        bias = jnp.pad(bias, (0, Np - N))

    # N tile: a multiple of 128 that divides Np (caps weight VMEM, gives an
    # extra parallel grid axis for v7x's two TensorCores).
    if Np <= 512:
        tn = Np
    elif Np % 512 == 0:
        tn = 512
    elif Np % 256 == 0:
        tn = 256
    else:
        tn = 128

    # Row tile: capped at 512, always a multiple of 128; pad M so grid is exact.
    tm = min(512, _round_up(M, 128))
    Mp = _round_up(M, tm)
    if Mp != M:
        xb = jnp.pad(xb, ((0, Mp - M), (0, 0)))

    grid = (Mp // tm, Np // tn)
    bias2 = bias.reshape(1, Np)

    kernel = functools.partial(_matmul_bias_kernel, relu6=relu6)
    out = pl.pallas_call(
        kernel,
        out_shape=jax.ShapeDtypeStruct((Mp, Np), jnp.float32),
        grid_spec=pltpu.PrefetchScalarGridSpec(
            num_scalar_prefetch=0,
            grid=grid,
            in_specs=[
                pl.BlockSpec((tm, K), lambda i, j: (i, 0)),   # X row-tile (bf16)
                pl.BlockSpec((K, tn), lambda i, j: (0, j)),   # W col-tile (bf16)
                pl.BlockSpec((1, tn), lambda i, j: (0, j)),   # bias (f32)
            ],
            out_specs=pl.BlockSpec((tm, tn), lambda i, j: (i, j)),
        ),
        compiler_params=pltpu.CompilerParams(
            dimension_semantics=("parallel", "parallel"),
            vmem_limit_bytes=48 * 1024 * 1024,   # fits v7x (64 MiB physical)
        ),
    )(xb, wb, bias2)
    return out[:M, :N]


# ----------------------------------------------------------------------------
# Plain-JAX glue: bf16 im2col (3x3 neighbourhoods, pad 1)
# ----------------------------------------------------------------------------
def _im2col3(x):
    """x: NHWC (f32).  Returns (N*H*W, 9*C) bf16 with (ty, tx, ci) ordering."""
    n, h, w, c = x.shape
    xp = jnp.pad(x.astype(jnp.bfloat16), ((0, 0), (1, 1), (1, 1), (0, 0)))
    patches = []
    for dy in range(3):
        for dx in range(3):
            patches.append(xp[:, dy:dy + h, dx:dx + w, :])
    cols = jnp.stack(patches, axis=3)                    # (N, H, W, 9, C)
    return cols.reshape(n * h * w, 9 * c)


def conv3x3(x, w_flat, bias, relu6):
    """3x3 conv, stride 1, pad 1; fused bias (+ ReLU6).  w_flat: (9*Cin, Cout)."""
    n, h, w, _ = x.shape
    cout = w_flat.shape[-1]
    out = matmul_bias_act(_im2col3(x), w_flat, bias, relu6)
    return out.reshape(n, h, w, cout)


def upsample_convt(x, w9, bias4):
    """ConvTranspose2d(k=4, s=2, p=1) as a 3x3 conv -> 4*Cout channels + pixel shuffle.

    w9: (9*Cin, 4*Cout) combined weight (see _convtranspose_to_conv3x3);
    bias4: (4*Cout,).
    """
    n, h, w, _ = x.shape
    cout = w9.shape[-1] // 4
    y = matmul_bias_act(_im2col3(x), w9, bias4, relu6=False)
    y = y.reshape(n, h, w, 2, 2, cout)
    y = jnp.transpose(y, (0, 1, 3, 2, 4, 5)).reshape(n, 2 * h, 2 * w, cout)
    return y


def _convtranspose_to_conv3x3(wf, bias):
    """wf: (4,4,Cin,Cout) flipped forward-conv layout of ConvTranspose2d(4,2,1).

    out[2m+py, 2n+px] = sum_{dy,dx in {0,1}} xpad[m+py+dy, n+px+dx] * wf[py+2dy, px+2dx]
    => one 3x3 conv (pad 1) producing (2,2,Cout) phase channels per position.
    """
    _, _, cin, cout = wf.shape
    w3 = jnp.zeros((3, 3, cin, 2, 2, cout), wf.dtype)
    for py in range(2):
        for px in range(2):
            for dy in range(2):
                for dx in range(2):
                    w3 = w3.at[py + dy, px + dx, :, py, px, :].set(
                        wf[py + 2 * dy, px + 2 * dx])
    return w3.reshape(9 * cin, 4 * cout), jnp.tile(bias, 4)


# ----------------------------------------------------------------------------
# Decoder parameters, host-side folding, forward
# ----------------------------------------------------------------------------
def is_pow2n(x):
    return x > 0 and x & (x - 1) == 0


def init_decoder_params(key, up_sample_ratio, out_chans=1, width=32):
    assert is_pow2n(up_sample_ratio)
    n = round(math.log2(up_sample_ratio))
    channels = [width // 2 ** i for i in range(n + 1)]
    blocks = []
    for cin, cout in zip(channels[:-1], channels[1:]):
        key, k1, k2, k3 = jax.random.split(key, 4)
        blocks.append(dict(
            # up_w stored in the equivalent forward-conv layout (4,4,Cin,Cout),
            # i.e. already spatially flipped relative to PyTorch (Cin,Cout,4,4).
            up_w=jax.random.normal(k1, (4, 4, cin, cin), jnp.float32) * 0.02,
            up_b=jnp.zeros((cin,), jnp.float32),          # init.constant_(bias, 0)
            conv1_w=jax.random.normal(k2, (3, 3, cin, cin), jnp.float32) * 0.02,
            conv2_w=jax.random.normal(k3, (3, 3, cin, cout), jnp.float32) * 0.02,
        ))
    key, kp = jax.random.split(key)
    proj_w = jax.random.normal(kp, (1, 1, channels[-1], out_chans), jnp.float32) * 0.02
    proj_b = jnp.zeros((out_chans,), jnp.float32)
    return dict(blocks=blocks, proj_w=proj_w, proj_b=proj_b, channels=channels)


def fold_decoder_params(params):
    """Fold eval-mode BN into conv weights, rewrite the transpose conv as a 3x3
    conv + pixel shuffle, and fuse the 1x1 projection into the last 3x3 conv."""
    # Eval-mode BN with fresh stats (mean=0, var=1, gamma=1, beta=0) folds into
    # a per-channel scale 1/sqrt(1+eps) and zero shift.
    # TODO(synk): training-mode BN (batch statistics) not implemented; eval-mode used.
    bn_scale = 1.0 / math.sqrt(1.0 + BN_EPS)

    n_blocks = len(params['blocks'])
    proj_w, proj_b = params['proj_w'], params['proj_b']
    folded = []
    for i, blk in enumerate(params['blocks']):
        cin = blk['conv1_w'].shape[-2]
        cout = blk['conv2_w'].shape[-1]

        up_w9, up_b4 = _convtranspose_to_conv3x3(blk['up_w'], blk['up_b'])

        c1_w = blk['conv1_w'].reshape(9 * cin, cin) * bn_scale
        c1_b = jnp.zeros((cin,), jnp.float32)

        c2_w = blk['conv2_w'].reshape(9 * cin, cout) * bn_scale
        c2_b = jnp.zeros((cout,), jnp.float32)
        if i == n_blocks - 1:
            # Fuse (eval-BN . 1x1 proj) into the final 3x3 conv: both linear.
            pw = proj_w.reshape(cout, proj_w.shape[-1])
            c2_b = proj_b + c2_b @ pw
            c2_w = c2_w @ pw

        folded.append(dict(
            up_w=up_w9.astype(jnp.bfloat16), up_b=up_b4.astype(jnp.float32),
            c1_w=c1_w.astype(jnp.bfloat16), c1_b=c1_b,
            c2_w=c2_w.astype(jnp.bfloat16), c2_b=c2_b.astype(jnp.float32),
        ))
    return folded


def decoder_forward(params, to_dec_nchw):
    """Matches Decoder.forward: x=0; x+=to_dec[i]; x=dec[i](x); return proj(x)."""
    to_dec = [None if t is None else jnp.transpose(t, (0, 2, 3, 1))   # NCHW -> NHWC
              for t in to_dec_nchw]
    blocks = fold_decoder_params(params)

    x = None
    for i, blk in enumerate(blocks):
        if i < len(to_dec) and to_dec[i] is not None:
            x = to_dec[i] if x is None else x + to_dec[i]
        # --- UNetBlock (up-sample, conv+BN+ReLU6, conv+BN [+ fused proj on last]) ---
        x = upsample_convt(x, blk['up_w'], blk['up_b'])
        x = conv3x3(x, blk['c1_w'], blk['c1_b'], relu6=True)
        x = conv3x3(x, blk['c2_w'], blk['c2_b'], relu6=False)
    return jnp.transpose(x, (0, 3, 1, 2))                  # NHWC -> NCHW


if __name__ == "__main__":
    up_sample_ratio = 4          # -> 2 UNet blocks
    width = 32                   # channels: [32, 16, 8]
    out_chans = 1
    params = init_decoder_params(jax.random.PRNGKey(42),
                                 up_sample_ratio, out_chans, width)

    key = jax.random.PRNGKey(0)
    k1, k2 = jax.random.split(key)
    # to_dec[i]: NCHW, channels = width // 2**i, spatial doubles per stage
    to_dec = [
        jax.random.normal(k1, (2, 32, 4, 4), jnp.float32),
        jax.random.normal(k2, (2, 16, 8, 8), jnp.float32),
    ]

    out = decoder_forward(params, to_dec)
    jax.block_until_ready(out)
    assert out.shape == (2, 1, 16, 16), out.shape
    print("KERNEL_OK")
</pallas_src>

<mosaic_0001>
module attributes {stable_mosaic.version = 11 : i64} {
  func.func @_matmul_bias_kernel(%arg0: i32, %arg1: i32, %arg2: memref<128x288xbf16, #tpu.memory_space<vmem>>, %arg3: memref<288x128xbf16, #tpu.memory_space<vmem>>, %arg4: memref<1x128xf32, #tpu.memory_space<vmem>>, %arg5: memref<128x128xf32, #tpu.memory_space<vmem>>) attributes {dimension_semantics = [#tpu.dimension_semantics<parallel>, #tpu.dimension_semantics<parallel>], iteration_bounds = array<i64: 1, 1>, scalar_prefetch = 0 : i64, scratch_operands = 0 : i64, tpu.core_type = #tpu.core_type<tc>, window_params = [{transform_indices = @transform_0, window_bounds = array<i64: 128, 288>}, {transform_indices = @transform_1, window_bounds = array<i64: 288, 128>}, {transform_indices = @transform_2, window_bounds = array<i64: 1, 128>}, {transform_indices = @transform_3, window_bounds = array<i64: 128, 128>}]} {
    %c0 = arith.constant 0 : index
    %c0_0 = arith.constant 0 : index
    %0 = vector.load %arg2[%c0, %c0_0] : memref<128x288xbf16, #tpu.memory_space<vmem>>, vector<128x288xbf16>
    %c0_1 = arith.constant 0 : index
    %c0_2 = arith.constant 0 : index
    %1 = vector.load %arg3[%c0_1, %c0_2] : memref<288x128xbf16, #tpu.memory_space<vmem>>, vector<288x128xbf16>
    %cst = arith.constant dense<0.000000e+00> : vector<128x128xf32>
    %2 = tpu.matmul %0, %1, %cst {dimension_numbers = #tpu.dot_dimension_numbers<[1], [0], [0], [1], [0, 0, 1, 1], [], []>} : vector<128x288xbf16>, vector<288x128xbf16>, vector<128x128xf32> -> vector<128x128xf32>
    %c0_3 = arith.constant 0 : index
    %c0_4 = arith.constant 0 : index
    %3 = vector.load %arg4[%c0_3, %c0_4] : memref<1x128xf32, #tpu.memory_space<vmem>>, vector<1x128xf32>
    %4 = vector.broadcast %3 : vector<1x128xf32> to vector<128x128xf32>
    %5 = arith.addf %2, %4 : vector<128x128xf32>
    %c0_5 = arith.constant 0 : index
    %c0_6 = arith.constant 0 : index
    %6 = vector.load %arg5[%c0_5, %c0_6] : memref<128x128xf32, #tpu.memory_space<vmem>>, vector<128x128xf32>
    tpu.vector_store %arg5[%c0_5, %c0_6], %5 {strides = array<i32>} : memref<128x128xf32, #tpu.memory_space<vmem>>, vector<128x128xf32>,
    return
  }
  func.func @transform_0(%arg0: i32, %arg1: i32) -> (i32, i32) {
    %c0_i32 = arith.constant 0 : i32
    %c0_i32_0 = arith.constant 0 : i32
    return %arg0, %c0_i32 : i32, i32
  }
  func.func @transform_1(%arg0: i32, %arg1: i32) -> (i32, i32) {
    %c0_i32 = arith.constant 0 : i32
    %c0_i32_0 = arith.constant 0 : i32
    return %c0_i32, %arg1 : i32, i32
  }
  func.func @transform_2(%arg0: i32, %arg1: i32) -> (i32, i32) {
    %c0_i32 = arith.constant 0 : i32
    %c0_i32_0 = arith.constant 0 : i32
    return %c0_i32, %arg1 : i32, i32
  }
  func.func @transform_3(%arg0: i32, %arg1: i32) -> (i32, i32) {
    %c0_i32 = arith.constant 0 : i32
    return %arg0, %arg1 : i32, i32
  }
}

</mosaic_0001>

<llo_original>
// kernel: tpu_custom_call.1
$region0: #{tpu_custom_call.1}
  #allocation0 [shape = 'u32[]', space=smem, size = 0x4, offset = 0x4, fixed_abs, tag = 'smem constant byte address 0x4 - core index']
  #allocation1 [shape = 'u32[144,128]{1,0:T(1,128)}', space=vmem, size = 0x12000, scoped, tag = 'internal scratch']
  %s0 = inlined_call_operand.vmem [shape: bf16[128,288], index: 0, kind: input, shape index: {}]
  %s1 = inlined_call_operand.vmem [shape: bf16[288,128], index: 1, kind: input, shape index: {}]
  %s2 = inlined_call_operand.vmem [shape: f32[1,128], index: 2, kind: input, shape index: {}]
  %s3 = inlined_call_operand.hbm [shape: f32[128,128], index: 3, kind: output, shape index: {}]
  %s4 = sld [smem:[#allocation0]]
  $region22: #{tpu_custom_call.1} parent=0
    _
  %s6 = ssub.s32 1, %s4
  %s7 = scalar_select 0, %s6, %s4
  $region1: #{tpu_custom_call.1} parent=0
    #allocation2 [shape = 'u8[65536]{0}', space=vmem, size = 0x10000, scoped, tag = 'output window, operand 0, single buffered']
    #allocation3 [shape = 's32[1]{0}', space=sflag, size = 0x4, scoped, tag = 'scoped memory for tpu_custom_call.1']
    %8 = vsyncpa [#allocation3], 0
    // Predicated region
    $region2: #{tpu_custom_call.1} parent=1 // pred_check
      _
    $region3: #{tpu_custom_call.1} parent=1 // pred_check_branch
      %10 = sbr.rel (0) target = $region5
    $region4: #{tpu_custom_call.1} parent=1 // pred_region
      _
    $region5: #{tpu_custom_call.1} parent=1 // pred_fallthru
      _
    // Predicated region
    $region6: #{tpu_custom_call.1} parent=1 // pred_check
      _
    $region7: #{tpu_custom_call.1} parent=1 // pred_check_branch
      %12 = sbr.rel (0) target = $region9
    $region8: #{tpu_custom_call.1} parent=1 // pred_region
      _
    $region9: #{tpu_custom_call.1} parent=1 // pred_fallthru
      _
    // Predicated region
    $region10: #{tpu_custom_call.1} parent=1 // pred_check
      _
    $region11: #{tpu_custom_call.1} parent=1 // pred_check_branch
      %14 = sbr.rel (0) target = $region13
    $region12: #{tpu_custom_call.1} parent=1 // pred_region
      _
    $region13: #{tpu_custom_call.1} parent=1 // pred_fallthru
      _
    %v16 = vld [vmem:[%s0] sm:$0xff]
    %v17 = vld [vmem:[%s0 + $0x8] sm:$0xf]
    %v18 = vld [vmem:[%s0 + $0xc] sm:$0xff]
    %v19 = vld [vmem:[%s0 + $0x14] sm:$0xf]
    %v20 = vld [vmem:[%s0 + $0x18] sm:$0xff]
    %v21 = vld [vmem:[%s0 + $0x20] sm:$0xf]
    %v22 = vld [vmem:[%s0 + $0x24] sm:$0xff]
    %v23 = vld [vmem:[%s0 + $0x2c] sm:$0xf]
    %v24 = vld [vmem:[%s0 + $0x30] sm:$0xff]
    %v25 = vld [vmem:[%s0 + $0x38] sm:$0xf]
    %v26 = vld [vmem:[%s0 + $0x3c] sm:$0xff]
    %v27 = vld [vmem:[%s0 + $0x44] sm:$0xf]
    %v28 = vld [vmem:[%s0 + $0x48] sm:$0xff]
    %v29 = vld [vmem:[%s0 + $0x50] sm:$0xf]
    %v30 = vld [vmem:[%s0 + $0x54] sm:$0xff]
    %v31 = vld [vmem:[%s0 + $0x5c] sm:$0xf]
    %v32 = vld [vmem:[%s0 + $0x60] sm:$0xff]
    %v33 = vld [vmem:[%s0 + $0x68] sm:$0xf]
    %v34 = vld [vmem:[%s0 + $0x6c] sm:$0xff]
    %v35 = vld [vmem:[%s0 + $0x74] sm:$0xf]
    %v36 = vld [vmem:[%s0 + $0x78] sm:$0xff]
    %v37 = vld [vmem:[%s0 + $0x80] sm:$0xf]
    %v38 = vld [vmem:[%s0 + $0x84] sm:$0xff]
    %v39 = vld [vmem:[%s0 + $0x8c] sm:$0xf]
    %v40 = vld [vmem:[%s0 + $0x90] sm:$0xff]
    %v41 = vld [vmem:[%s0 + $0x98] sm:$0xf]
    %v42 = vld [vmem:[%s0 + $0x9c] sm:$0xff]
    %v43 = vld [vmem:[%s0 + $0xa4] sm:$0xf]
    %v44 = vld [vmem:[%s0 + $0xa8] sm:$0xff]
    %v45 = vld [vmem:[%s0 + $0xb0] sm:$0xf]
    %v46 = vld [vmem:[%s0 + $0xb4] sm:$0xff]
    %v47 = vld [vmem:[%s0 + $0xbc] sm:$0xf]
    %v48 = vld [vmem:[%s1] sm:$0xf]
    %v49 = vld [vmem:[%s1 + $0x4] sm:$0xf]
    %v50 = vld [vmem:[%s1 + $0x8] sm:$0xf]
    %v51 = vld [vmem:[%s1 + $0xc] sm:$0xf]
    %v52 = vld [vmem:[%s1 + $0x10] sm:$0xf]
    %v53 = vld [vmem:[%s1 + $0x14] sm:$0xf]
    %v54 = vld [vmem:[%s1 + $0x18] sm:$0xf]
    %v55 = vld [vmem:[%s1 + $0x1c] sm:$0xf]
    %v56 = vld [vmem:[%s1 + $0x20] sm:$0xf]
    %v57 = vld [vmem:[%s1 + $0x24] sm:$0xf]
    %v58 = vld [vmem:[%s1 + $0x28] sm:$0xf]
    %v59 = vld [vmem:[%s1 + $0x2c] sm:$0xf]
    %v60 = vld [vmem:[%s1 + $0x30] sm:$0xf]
    %v61 = vld [vmem:[%s1 + $0x34] sm:$0xf]
    %v62 = vld [vmem:[%s1 + $0x38] sm:$0xf]
    %v63 = vld [vmem:[%s1 + $0x3c] sm:$0xf]
    %v64 = vld [vmem:[%s1 + $0x40] sm:$0xf]
    %v65 = vld [vmem:[%s1 + $0x44] sm:$0xf]
    %v66 = vld [vmem:[%s1 + $0x48] sm:$0xf]
    %v67 = vld [vmem:[%s1 + $0x4c] sm:$0xf]
    %v68 = vld [vmem:[%s1 + $0x50] sm:$0xf]
    %v69 = vld [vmem:[%s1 + $0x54] sm:$0xf]
    %v70 = vld [vmem:[%s1 + $0x58] sm:$0xf]
    %v71 = vld [vmem:[%s1 + $0x5c] sm:$0xf]
    %v72 = vld [vmem:[%s1 + $0x60] sm:$0xf]
    %v73 = vld [vmem:[%s1 + $0x64] sm:$0xf]
    %v74 = vld [vmem:[%s1 + $0x68] sm:$0xf]
    %v75 = vld [vmem:[%s1 + $0x6c] sm:$0xf]
    %v76 = vld [vmem:[%s1 + $0x70] sm:$0xf]
    %v77 = vld [vmem:[%s1 + $0x74] sm:$0xf]
    %v78 = vld [vmem:[%s1 + $0x78] sm:$0xf]
    %v79 = vld [vmem:[%s1 + $0x7c] sm:$0xf]
    %v80 = vld [vmem:[%s1 + $0x80] sm:$0xf]
    %v81 = vld [vmem:[%s1 + $0x84] sm:$0xf]
    %v82 = vld [vmem:[%s1 + $0x88] sm:$0xf]
    %v83 = vld [vmem:[%s1 + $0x8c] sm:$0xf]
    %v84 = vld [vmem:[%s2] sm:$0x1]
    %v86 = vlaneseq
    %v87 = vshrl.u32 %v86, 7
    %v88 = vsub.s32 0, %v87
    %v89 = vrot.slane %v84, %v88
    %v123 = vunpack.c.l.b16 %v16
    %v124 = vunpack.c.h.b16 %v16
    %v125 = vunpack.c.l.b16 %v17
    %v126 = vunpack.c.l.b16 %v18
    %v127 = vunpack.c.h.b16 %v18
    %v128 = vunpack.c.l.b16 %v19
    %v129 = vunpack.c.l.b16 %v20
    %v130 = vunpack.c.h.b16 %v20
    %v131 = vunpack.c.l.b16 %v21
    %v132 = vunpack.c.l.b16 %v22
    %v133 = vunpack.c.h.b16 %v22
    %v134 = vunpack.c.l.b16 %v23
    %v135 = vunpack.c.l.b16 %v24
    %v136 = vunpack.c.h.b16 %v24
    %v137 = vunpack.c.l.b16 %v25
    %v138 = vunpack.c.l.b16 %v26
    %v139 = vunpack.c.h.b16 %v26
    %v140 = vunpack.c.l.b16 %v27
    %v141 = vunpack.c.l.b16 %v28
    %v142 = vunpack.c.h.b16 %v28
    %v143 = vunpack.c.l.b16 %v29
    %v144 = vunpack.c.l.b16 %v30
    %v145 = vunpack.c.h.b16 %v30
    %v146 = vunpack.c.l.b16 %v31
    %v147 = vunpack.c.l.b16 %v32
    %v148 = vunpack.c.h.b16 %v32
    %v149 = vunpack.c.l.b16 %v33
    %v150 = vunpack.c.l.b16 %v34
    %v151 = vunpack.c.h.b16 %v34
    %v152 = vunpack.c.l.b16 %v35
    %v153 = vunpack.c.l.b16 %v36
    %v154 = vunpack.c.h.b16 %v36
    %v155 = vunpack.c.l.b16 %v37
    %v156 = vunpack.c.l.b16 %v38
    %v157 = vunpack.c.h.b16 %v38
    %v158 = vunpack.c.l.b16 %v39
    %v159 = vunpack.c.l.b16 %v40
    %v160 = vunpack.c.h.b16 %v40
    %v161 = vunpack.c.l.b16 %v41
    %v162 = vunpack.c.l.b16 %v42
    %v163 = vunpack.c.h.b16 %v42
    %v164 = vunpack.c.l.b16 %v43
    %v165 = vunpack.c.l.b16 %v44
    %v166 = vunpack.c.h.b16 %v44
    %v167 = vunpack.c.l.b16 %v45
    %v168 = vunpack.c.l.b16 %v46
    %v169 = vunpack.c.h.b16 %v46
    %v170 = vunpack.c.l.b16 %v47
    %v171 = vpack.c.b16 %v126, %v123
    %v172 = vpack.c.b16 %v127, %v124
    %v173 = vpack.c.b16 %v128, %v125
    %v174 = vpack.c.b16 %v132, %v129
    %v175 = vpack.c.b16 %v133, %v130
    %v176 = vpack.c.b16 %v134, %v131
    %v177 = vpack.c.b16 %v138, %v135
    %v178 = vpack.c.b16 %v139, %v136
    %v179 = vpack.c.b16 %v140, %v137
    %v180 = vpack.c.b16 %v144, %v141
    %v181 = vpack.c.b16 %v145, %v142
    %v182 = vpack.c.b16 %v146, %v143
    %v183 = vpack.c.b16 %v150, %v147
    %v184 = vpack.c.b16 %v151, %v148
    %v185 = vpack.c.b16 %v152, %v149
    %v186 = vpack.c.b16 %v156, %v153
    %v187 = vpack.c.b16 %v157, %v154
    %v188 = vpack.c.b16 %v158, %v155
    %v189 = vpack.c.b16 %v162, %v159
    %v190 = vpack.c.b16 %v163, %v160
    %v191 = vpack.c.b16 %v164, %v161
    %v192 = vpack.c.b16 %v168, %v165
    %v193 = vpack.c.b16 %v169, %v166
    %v194 = vpack.c.b16 %v170, %v167
    %v247 = vunpack.c.l.b16 %v48
    %v248 = vunpack.c.l.b16 %v49
    %v249 = vunpack.c.l.b16 %v50
    %v250 = vunpack.c.l.b16 %v51
    %v251 = vunpack.c.l.b16 %v52
    %v252 = vunpack.c.l.b16 %v53
    %v253 = vunpack.c.l.b16 %v54
    %v254 = vunpack.c.l.b16 %v55
    %v255 = vunpack.c.l.b16 %v56
    %v256 = vunpack.c.l.b16 %v57
    %v257 = vunpack.c.l.b16 %v58
    %v258 = vunpack.c.l.b16 %v59
    %v259 = vunpack.c.l.b16 %v60
    %v260 = vunpack.c.l.b16 %v61
    %v261 = vunpack.c.l.b16 %v62
    %v262 = vunpack.c.l.b16 %v63
    %v263 = vunpack.c.l.b16 %v64
    %v264 = vunpack.c.l.b16 %v65
    %v265 = vunpack.c.l.b16 %v66
    %v266 = vunpack.c.l.b16 %v67
    %v267 = vunpack.c.l.b16 %v68
    %v268 = vunpack.c.l.b16 %v69
    %v269 = vunpack.c.l.b16 %v70
    %v270 = vunpack.c.l.b16 %v71
    %v271 = vunpack.c.l.b16 %v72
    %v272 = vunpack.c.l.b16 %v73
    %v273 = vunpack.c.l.b16 %v74
    %v274 = vunpack.c.l.b16 %v75
    %v275 = vunpack.c.l.b16 %v76
    %v276 = vunpack.c.l.b16 %v77
    %v277 = vunpack.c.l.b16 %v78
    %v278 = vunpack.c.l.b16 %v79
    %v279 = vunpack.c.l.b16 %v80
    %v280 = vunpack.c.l.b16 %v81
    %v281 = vunpack.c.l.b16 %v82
    %v282 = vunpack.c.l.b16 %v83
    %v283 = vpack.c.b16 %v248, %v247
    %v284 = vpack.c.b16 %v250, %v249
    %v285 = vpack.c.b16 %v252, %v251
    %v286 = vpack.c.b16 %v254, %v253
    %v287 = vpack.c.b16 %v256, %v255
    %v288 = vpack.c.b16 %v258, %v257
    %v289 = vpack.c.b16 %v260, %v259
    %v290 = vpack.c.b16 %v262, %v261
    %v291 = vpack.c.b16 %v264, %v263
    %v292 = vpack.c.b16 %v266, %v265
    %v293 = vpack.c.b16 %v268, %v267
    %v294 = vpack.c.b16 %v270, %v269
    %v295 = vpack.c.b16 %v272, %v271
    %v296 = vpack.c.b16 %v274, %v273
    %v297 = vpack.c.b16 %v276, %v275
    %v298 = vpack.c.b16 %v278, %v277
    %v299 = vpack.c.b16 %v280, %v279
    %v300 = vpack.c.b16 %v282, %v281
    %vm319 = vcmask 261120
    %v321 = vsel %vm319, %v173, 0
    %v324 = vsel %vm319, %v176, 0
    %v327 = vsel %vm319, %v179, 0
    %v330 = vsel %vm319, %v182, 0
    %v333 = vsel %vm319, %v185, 0
    %v336 = vsel %vm319, %v188, 0
    %v339 = vsel %vm319, %v191, 0
    %v342 = vsel %vm319, %v194, 0
    %344 = vmatprep.subr.bf16.mxu0 0
    %345 = vmatpush1.bf16.msra.mxu0 %v283
    %346 = vmatprep.subr.bf16.mxu0 0
    %347 = vmatpush1.bf16.msra.mxu0 %v284
    %348 = vmatprep.subr.bf16.mxu0 0
    %349 = vmatpush1.bf16.msra.mxu0 %v285
    %350 = vmatprep.subr.bf16.mxu0 0
    %351 = vmatpush1.bf16.msra.mxu0 %v286
    %352 = vmatprep.subr.bf16.mxu0 0
    %353 = vmatpush1.bf16.msra.mxu0 %v287
    %354 = vmatprep.subr.bf16.mxu0 0
    %355 = vmatpush1.bf16.msra.mxu0 %v288
    %356 = vmatprep.subr.bf16.mxu0 0
    %357 = vmatpush1.bf16.msra.mxu0 %v289
    %358 = vmatprep.subr.bf16.mxu0 0
    %359 = vmatpush1.bf16.msra.mxu0 %v290
    %360 = vmatprep.subr.bf16.mxu0 0
    %361 = vmatpush1.bf16.msra.mxu0 %v291
    %362 = vmatprep.subr.bf16.mxu0 0
    %363 = vmatpush1.bf16.msra.mxu0 %v292
    %364 = vmatprep.subr.bf16.mxu0 0
    %365 = vmatpush1.bf16.msra.mxu0 %v293
    %366 = vmatprep.subr.bf16.mxu0 0
    %367 = vmatpush1.bf16.msra.mxu0 %v294
    %368 = vmatprep.subr.bf16.mxu0 0
    %369 = vmatpush1.bf16.msra.mxu0 %v295
    %370 = vmatprep.subr.bf16.mxu0 0
    %371 = vmatpush1.bf16.msra.mxu0 %v296
    %372 = vmatprep.subr.bf16.mxu0 0
    %373 = vmatpush1.bf16.msra.mxu0 %v297
    %374 = vmatprep.subr.bf16.mxu0 0
    %375 = vmatpush1.bf16.msra.mxu0 %v298
    %376 = vmatprep.mubr.bf16.mxu0 %v172
    %377 = vmatmul.mubr.bf16.gmra.mrb[0].mxu0 %v171
    %v378 = vpop.f32.mrb[0].mxu0
    %v379 = vadd.f32 %v89, %v378
    %v380 = vpop.f32.mrb[0].mxu0
    %v381 = vpop.f32.mrb[0].mxu0
    %v382 = vadd.f32 %v89, %v381
    %v383 = vpop.f32.mrb[0].mxu0
    %384 = vmatprep.mubr.bf16.mxu0 %v175
    %385 = vmatmul.mubr.bf16.gmra.mrb[0].mxu0 %v174
    %v386 = vpop.f32.mrb[0].mxu0
    %v387 = vadd.f32 %v89, %v386
    %v388 = vpop.f32.mrb[0].mxu0
    %v389 = vpop.f32.mrb[0].mxu0
    %v390 = vadd.f32 %v89, %v389
    %v391 = vpop.f32.mrb[0].mxu0
    %392 = vmatprep.mubr.bf16.mxu0 %v178
    %393 = vmatmul.mubr.bf16.gmra.mrb[0].mxu0 %v177
    %v394 = vpop.f32.mrb[0].mxu0
    %v395 = vadd.f32 %v89, %v394
    %v396 = vpop.f32.mrb[0].mxu0
    %v397 = vpop.f32.mrb[0].mxu0
    %v398 = vadd.f32 %v89, %v397
    %v399 = vpop.f32.mrb[0].mxu0
    %400 = vmatprep.mubr.bf16.mxu0 %v181
    %401 = vmatmul.mubr.bf16.gmra.mrb[0].mxu0 %v180
    %v402 = vpop.f32.mrb[0].mxu0
    %v403 = vadd.f32 %v89, %v402
    %v404 = vpop.f32.mrb[0].mxu0
    %v405 = vpop.f32.mrb[0].mxu0
    %v406 = vadd.f32 %v89, %v405
    %v407 = vpop.f32.mrb[0].mxu0
    %408 = vmatprep.mubr.bf16.mxu0 %v184
    %409 = vmatmul.mubr.bf16.gmra.mrb[0].mxu0 %v183
    %v410 = vpop.f32.mrb[0].mxu0
    %v411 = vadd.f32 %v89, %v410
    %v412 = vpop.f32.mrb[0].mxu0
    %v413 = vpop.f32.mrb[0].mxu0
    %v414 = vadd.f32 %v89, %v413
    %v415 = vpop.f32.mrb[0].mxu0
    %416 = vmatprep.mubr.bf16.mxu0 %v187
    %417 = vmatmul.mubr.bf16.gmra.mrb[0].mxu0 %v186
    %v418 = vpop.f32.mrb[0].mxu0
    %v419 = vadd.f32 %v89, %v418
    %v420 = vpop.f32.mrb[0].mxu0
    %v421 = vpop.f32.mrb[0].mxu0
    %v422 = vadd.f32 %v89, %v421
    %v423 = vpop.f32.mrb[0].mxu0
    %424 = vmatprep.mubr.bf16.mxu0 %v190
    %425 = vmatmul.mubr.bf16.gmra.mrb[0].mxu0 %v189
    %v426 = vpop.f32.mrb[0].mxu0
    %v427 = vadd.f32 %v89, %v426
    %v428 = vpop.f32.mrb[0].mxu0
    %v429 = vpop.f32.mrb[0].mxu0
    %v430 = vadd.f32 %v89, %v429
    %v431 = vpop.f32.mrb[0].mxu0
    %432 = vmatprep.mubr.bf16.mxu0 %v193
    %433 = vmatmul.mubr.bf16.gmra.mrb[0].mxu0 %v192
    %v434 = vpop.f32.mrb[0].mxu0
    %v435 = vadd.f32 %v89, %v434
    %v436 = vpop.f32.mrb[0].mxu0
    %v437 = vpop.f32.mrb[0].mxu0
    %v438 = vadd.f32 %v89, %v437
    %v439 = vpop.f32.mrb[0].mxu0
    %440 = vdwg.mxu0
    %441 = vmatprep.subr.bf16.mxu0 0
    %442 = vmatpush1.bf16.msra.mxu0 %v299
    %443 = vmatprep.subr.bf16.mxu0 0
    %444 = vmatpush1.bf16.msra.mxu0 %v300
    %445 = vmatprep.subr.bf16.mxu0 0
    %446 = vmatpush1.bf16.msra.mxu0 0
    %447 = vmatprep.subr.bf16.mxu0 0
    %448 = vmatpush1.bf16.msra.mxu0 0
    %449 = vmatprep.subr.bf16.mxu0 0
    %450 = vmatpush1.bf16.msra.mxu0 0
    %451 = vmatprep.subr.bf16.mxu0 0
    %452 = vmatpush1.bf16.msra.mxu0 0
    %453 = vmatprep.subr.bf16.mxu0 0
    %454 = vmatpush1.bf16.msra.mxu0 0
    %455 = vmatprep.subr.bf16.mxu0 0
    %456 = vmatpush1.bf16.msra.mxu0 0
    %457 = vmatprep.subr.bf16.mxu0 0
    %458 = vmatpush1.bf16.msra.mxu0 0
    %459 = vmatprep.subr.bf16.mxu0 0
    %460 = vmatpush1.bf16.msra.mxu0 0
    %461 = vmatprep.subr.bf16.mxu0 0
    %462 = vmatpush1.bf16.msra.mxu0 0
    %463 = vmatprep.subr.bf16.mxu0 0
    %464 = vmatpush1.bf16.msra.mxu0 0
    %465 = vmatprep.subr.bf16.mxu0 0
    %466 = vmatpush1.bf16.msra.mxu0 0
    %467 = vmatprep.subr.bf16.mxu0 0
    %468 = vmatpush1.bf16.msra.mxu0 0
    %469 = vmatprep.subr.bf16.mxu0 0
    %470 = vmatpush1.bf16.msra.mxu0 0
    %471 = vmatprep.subr.bf16.mxu0 0
    %472 = vmatpush1.bf16.msra.mxu0 0
    %473 = vmatprep.mubr.bf16.mxu0 0
    %474 = vmatmul.mubr.bf16.gmra.mrb[0].mxu0 %v321
    %v475 = vpop.f32.mrb[0].mxu0
    %v476 = vadd.f32 %v379, %v475
    %v477 = vpop.f32.mrb[0].mxu0
    %v478 = vpop.f32.mrb[0].mxu0
    %v479 = vadd.f32 %v382, %v478
    %v480 = vpop.f32.mrb[0].mxu0
    %481 = vmatprep.mubr.bf16.mxu0 0
    %482 = vmatmul.mubr.bf16.gmra.mrb[0].mxu0 %v324
    %v483 = vpop.f32.mrb[0].mxu0
    %v484 = vadd.f32 %v387, %v483
    %v485 = vpop.f32.mrb[0].mxu0
    %v486 = vpop.f32.mrb[0].mxu0
    %v487 = vadd.f32 %v390, %v486
    %v488 = vpop.f32.mrb[0].mxu0
    %489 = vmatprep.mubr.bf16.mxu0 0
    %490 = vmatmul.mubr.bf16.gmra.mrb[0].mxu0 %v327
    %v491 = vpop.f32.mrb[0].mxu0
    %v492 = vadd.f32 %v395, %v491
    %v493 = vpop.f32.mrb[0].mxu0
    %v494 = vpop.f32.mrb[0].mxu0
    %v495 = vadd.f32 %v398, %v494
    %v496 = vpop.f32.mrb[0].mxu0
    %497 = vmatprep.mubr.bf16.mxu0 0
    %498 = vmatmul.mubr.bf16.gmra.mrb[0].mxu0 %v330
    %v499 = vpop.f32.mrb[0].mxu0
    %v500 = vadd.f32 %v403, %v499
    %v501 = vpop.f32.mrb[0].mxu0
    %v502 = vpop.f32.mrb[0].mxu0
    %v503 = vadd.f32 %v406, %v502
    %v504 = vpop.f32.mrb[0].mxu0
    %505 = vmatprep.mubr.bf16.mxu0 0
    %506 = vmatmul.mubr.bf16.gmra.mrb[0].mxu0 %v333
    %v507 = vpop.f32.mrb[0].mxu0
    %v508 = vadd.f32 %v411, %v507
    %v509 = vpop.f32.mrb[0].mxu0
    %v510 = vpop.f32.mrb[0].mxu0
    %v511 = vadd.f32 %v414, %v510
    %v512 = vpop.f32.mrb[0].mxu0
    %513 = vmatprep.mubr.bf16.mxu0 0
    %514 = vmatmul.mubr.bf16.gmra.mrb[0].mxu0 %v336
    %v515 = vpop.f32.mrb[0].mxu0
    %v516 = vadd.f32 %v419, %v515
    %v517 = vpop.f32.mrb[0].mxu0
    %v518 = vpop.f32.mrb[0].mxu0
    %v519 = vadd.f32 %v422, %v518
    %v520 = vpop.f32.mrb[0].mxu0
    %521 = vmatprep.mubr.bf16.mxu0 0
    %522 = vmatmul.mubr.bf16.gmra.mrb[0].mxu0 %v339
    %v523 = vpop.f32.mrb[0].mxu0
    %v524 = vadd.f32 %v427, %v523
    %v525 = vpop.f32.mrb[0].mxu0
    %v526 = vpop.f32.mrb[0].mxu0
    %v527 = vadd.f32 %v430, %v526
    %v528 = vpop.f32.mrb[0].mxu0
    %529 = vmatprep.mubr.bf16.mxu0 0
    %530 = vmatmul.mubr.bf16.gmra.mrb[0].mxu0 %v342
    %v531 = vpop.f32.mrb[0].mxu0
    %v532 = vadd.f32 %v435, %v531
    %v533 = vpop.f32.mrb[0].mxu0
    %v534 = vpop.f32.mrb[0].mxu0
    %v535 = vadd.f32 %v438, %v534
    %v536 = vpop.f32.mrb[0].mxu0
    %537 = vdwg.mxu0
    %538 = vst [vmem:[#allocation2] sm:$0xff] %v476
    %539 = vst [vmem:[#allocation2 + $0x8] sm:$0xff] %v479
    %540 = vst [vmem:[#allocation2 + $0x10] sm:$0xff] %v484
    %541 = vst [vmem:[#allocation2 + $0x18] sm:$0xff] %v487
    %542 = vst [vmem:[#allocation2 + $0x20] sm:$0xff] %v492
    %543 = vst [vmem:[#allocation2 + $0x28] sm:$0xff] %v495
    %544 = vst [vmem:[#allocation2 + $0x30] sm:$0xff] %v500
    %545 = vst [vmem:[#allocation2 + $0x38] sm:$0xff] %v503
    %546 = vst [vmem:[#allocation2 + $0x40] sm:$0xff] %v508
    %547 = vst [vmem:[#allocation2 + $0x48] sm:$0xff] %v511
    %548 = vst [vmem:[#allocation2 + $0x50] sm:$0xff] %v516
    %549 = vst [vmem:[#allocation2 + $0x58] sm:$0xff] %v519
    %550 = vst [vmem:[#allocation2 + $0x60] sm:$0xff] %v524
    %551 = vst [vmem:[#allocation2 + $0x68] sm:$0xff] %v527
    %552 = vst [vmem:[#allocation2 + $0x70] sm:$0xff] %v532
    %553 = vst [vmem:[#allocation2 + $0x78] sm:$0xff] %v535
    // Predicated region
    $region14: #{tpu_custom_call.1} parent=1 // pred_check
      _
    $region15: #{tpu_custom_call.1} parent=1 // pred_check_branch
      %555 = sbr.rel (0) target = $region17
    $region16: #{tpu_custom_call.1} parent=1 // pred_region
      %s557 = ssub.s32 2048, 2048
      %558 = vsyncadd [#allocation3], %s557
      %s559 = sshll.u32 [#allocation2], 4
      %s560 = int_to_ptr.vmem [resolvable:$true] %s559
      %565 = dma.vmem_to_hbm [thread:$0]  %s560, 2048, %s3, [#allocation3], 128, 128, 8
    $region17: #{tpu_custom_call.1} parent=1 // pred_fallthru
      _
    // Predicated region
    $region18: #{tpu_custom_call.1} parent=1 // pred_check
      _
    $region19: #{tpu_custom_call.1} parent=1 // pred_check_branch
      %567 = sbr.rel (0) target = $region21
    $region20: #{tpu_custom_call.1} parent=1 // pred_region
      %568 = dma.done [#allocation3], 2048
    $region21: #{tpu_custom_call.1} parent=1 // pred_fallthru
      _
    %569 = vsyncpa [#allocation3], 1

</llo_original>
